<compile_context>
chip_gen: v6e
topology: v6e:2x2x1
jax: 0.10.0
libtpu: 0.0.40
codegen_flags: <defaults>
</compile_context>

<pallas_src>
import math

import jax
import jax.numpy as jnp
import numpy as np
from jax import lax
from jax.experimental import pallas as pl
from jax.experimental.pallas import tpu as pltpu

MXU_DTYPE = jnp.bfloat16       # dtype fed to the MXU (accumulation stays f32)
GELU_APPROXIMATE = False       # False = exact erf GELU (PyTorch default semantics)
LN_EPS = 1e-5                  # nn.LayerNorm default


# ------------------------------ small helpers --------------------------------

def _layernorm(x, g, b, eps=LN_EPS):
    mu = jnp.mean(x, axis=-1, keepdims=True)
    xc = x - mu
    var = jnp.mean(xc * xc, axis=-1, keepdims=True)
    return xc * lax.rsqrt(var + eps) * g + b


def _gelu(x):
    return jax.nn.gelu(x, approximate=GELU_APPROXIMATE)


# ----------------------------- FeatEncode kernel ------------------------------

def featenc_kernel(ef_ref, ts_ref, tw_ref, wf_ref, wt_ref, b_ref, out_ref):
    # TimeEncode: cos(t * w)  (bias is zero by construction)
    time_feats = jnp.cos(ts_ref[...] * tw_ref[...])                     # [TE, Td] f32
    acc = jnp.dot(ef_ref[...], wf_ref[...],
                  preferred_element_type=jnp.float32)
    acc = acc + jnp.dot(time_feats.astype(MXU_DTYPE), wt_ref[...],
                        preferred_element_type=jnp.float32)
    out_ref[...] = acc + b_ref[...]


def feat_encode(edge_feats, edge_ts, time_w, feat_wf, feat_wt, feat_b):
    E, C = edge_feats.shape
    Td = time_w.shape[1]
    H = feat_wf.shape[1]
    TE = min(E, 512)                             # row tile (pipelined over E)
    ts2d = edge_ts.reshape(E, 1).astype(jnp.float32)
    return pl.pallas_call(
        featenc_kernel,
        grid=(pl.cdiv(E, TE),),
        in_specs=[
            pl.BlockSpec((TE, C), lambda e: (e, 0)),
            pl.BlockSpec((TE, 1), lambda e: (e, 0)),
            pl.BlockSpec((1, Td), lambda e: (0, 0)),
            pl.BlockSpec((C, H), lambda e: (0, 0)),
            pl.BlockSpec((Td, H), lambda e: (0, 0)),
            pl.BlockSpec((1, H), lambda e: (0, 0)),
        ],
        out_specs=pl.BlockSpec((TE, H), lambda e: (e, 0)),
        out_shape=jax.ShapeDtypeStruct((E, H), jnp.float32),
        compiler_params=pltpu.CompilerParams(dimension_semantics=("parallel",)),
    )(edge_feats.astype(MXU_DTYPE), ts2d, time_w, feat_wf, feat_wt, feat_b)


# ------------------------------- Mixer kernel ---------------------------------

def make_mixer_kernel(bt, P, H, Hc, Ptok, O):
    BTP = bt * P

    def kernel(x_ref,
               tw0_r, tw1_r, cw0_r, cw1_r, tb0_r, tb1_r, sp_r,
               fg_r, fb_r, hw_r, hb_r,
               y_ref, t_ref, o_ref):
        layer = pl.program_id(1)
        n_layers = pl.num_programs(1)

        # y_ref's block index is constant along the layer axis, so it stays resident
        # in VMEM across layers -> use it as the layer accumulator (no extra scratch).
        @pl.when(layer == 0)
        def _():
            y_ref[...] = x_ref[...]

        x = y_ref[...].reshape(BTP, H)                     # f32; free when P % 8 == 0

        # unpack the packed small per-layer params (prefix lane slices: cheap)
        sp = sp_r[0]                                        # (6, Kpad) f32
        tg, tb = sp[0:1, :H], sp[1:2, :H]                   # token LN gamma/beta
        cg, cb = sp[2:3, :H], sp[3:4, :H]                   # channel LN gamma/beta
        cb0, cb1 = sp[4:5, :Hc], sp[5:6, :H]                # channel MLP biases

        # ---- token mixer: one batched matmul pair over the graph axis ------------
        # weights kept in PyTorch [out, in] layout so H stays on the lane dim
        # throughout -> no activation transposes.
        xn3 = _layernorm(x, tg, tb).reshape(bt, P, H).astype(MXU_DTYPE)
        w0b = jnp.broadcast_to(tw0_r[0], (bt, Ptok, P))     # tiny bf16 broadcast
        h = jnp.einsum("gjp,gph->gjh", w0b, xn3,
                       preferred_element_type=jnp.float32)  # (bt, Ptok, H)
        h = _gelu(h + tb0_r[0])                             # + (Ptok, 1) bias
        w1b = jnp.broadcast_to(tw1_r[0], (bt, P, Ptok))
        tok = jnp.einsum("gpj,gjh->gph", w1b, h.astype(MXU_DTYPE),
                         preferred_element_type=jnp.float32) + tb1_r[0]
        x = x + tok.reshape(BTP, H)

        # ---- channel mixer: one [BTP, H] @ [H, Hc] matmul over all graphs --------
        xn = _layernorm(x, cg, cb)
        h = jnp.dot(xn.astype(MXU_DTYPE), cw0_r[0],
                    preferred_element_type=jnp.float32) + cb0
        h = _gelu(h)
        h = jnp.dot(h.astype(MXU_DTYPE), cw1_r[0],
                    preferred_element_type=jnp.float32) + cb1
        x = x + h

        y_ref[...] = x.reshape(bt, P, H)

        # ---- epilogue: final LN (in place), per-graph mean, fused mlp_head -------
        @pl.when(layer == n_layers - 1)
        def _():
            xf = _layernorm(x, fg_r[...], fb_r[...])        # (BTP, H)
            y_ref[...] = xf.reshape(bt, P, H)
            t = jnp.mean(xf.reshape(bt, P, H), axis=1)      # (bt, H): one reduce
            t_ref[...] = t.reshape(bt, 1, H)
            o = jnp.dot(t.astype(MXU_DTYPE), hw_r[...],
                        preferred_element_type=jnp.float32) + hb_r[...]
            o_ref[...] = o.reshape(bt, 1, O)

    return kernel


def _select_bt_and_vmem(B, P, H, Hc, O, Ptok, Kpad):
    """Pick graphs-per-step (BT) and a per-generation-safe vmem limit."""
    try:
        info = pltpu.get_tpu_info()
        vmem_cap = int(getattr(info, "vmem_capacity_bytes", 64 << 20))
    except Exception:                              # noqa: BLE001 - be robust off-TPU
        vmem_cap = 64 << 20                        # conservative v7x-sized fallback
    # ~48 MiB on v7x (64 MiB physical), ~96 MiB on v5e/v6e (128 MiB physical)
    budget = min((vmem_cap * 3) // 4, 100 << 20)

    def footprint(bt):
        rows = bt * P
        io = rows * H * 4                                          # one x/y buffer (f32)
        inter = rows * Hc * 6 + rows * H * 20                      # live intermediates (est.)
        wpl = (2 * Ptok * P + 2 * H * Hc) * 2 + (6 * Kpad + Ptok + P) * 4
        small_out = 2 * bt * (H + O) * 4
        consts = 2 * (2 * H * 4 + H * O * 2 + O * 4)
        return 4 * io + inter + 2 * wpl + small_out + consts + (2 << 20)

    bt = max(1, min(B, max(1, 512 // max(P, 1))))  # target ~512 rows in the channel matmul
    if B > 1:
        bt = min(bt, (B + 1) // 2)                 # >=2 batch blocks -> v7x megacore
    while bt > 1 and footprint(bt) > budget:
        bt -= 1
    while bt > 1 and B % bt != 0:                  # avoid padded remainder blocks
        bt -= 1
    vmem_bytes = int(min(budget, max(footprint(bt) + (4 << 20), 24 << 20)))
    return bt, vmem_bytes


def mixer_forward(x, params, num_layers):
    B, P, H = x.shape
    layers = params["layers"]
    Ptok = layers["tw0"].shape[1]
    Hc = layers["cw0"].shape[2]
    Kpad = layers["small"].shape[2]
    O = params["head_w"].shape[1]
    fg, fb = params["final_ln"]

    BT, vmem_bytes = _select_bt_and_vmem(B, P, H, Hc, O, Ptok, Kpad)
    grid = (pl.cdiv(B, BT), num_layers)

    rows_map = lambda b, l: (b, 0, 0)      # x / y / t / o blocks (constant over l)
    layer_map = lambda b, l: (l, 0, 0)     # streamed per-layer weights
    const_map = lambda b, l: (0, 0)        # final LN / head params

    in_specs = [
        pl.BlockSpec((BT, P, H), rows_map),        # x
        pl.BlockSpec((1, Ptok, P), layer_map),     # tw0  (bf16, [out,in])
        pl.BlockSpec((1, P, Ptok), layer_map),     # tw1  (bf16, [out,in])
        pl.BlockSpec((1, H, Hc), layer_map),       # cw0  (bf16)
        pl.BlockSpec((1, Hc, H), layer_map),       # cw1  (bf16)
        pl.BlockSpec((1, Ptok, 1), layer_map),     # tb0
        pl.BlockSpec((1, P, 1), layer_map),        # tb1
        pl.BlockSpec((1, 6, Kpad), layer_map),     # packed small params
        pl.BlockSpec((1, H), const_map),           # final LN gamma
        pl.BlockSpec((1, H), const_map),           # final LN beta
        pl.BlockSpec((H, O), const_map),           # head W (bf16)
        pl.BlockSpec((1, O), const_map),           # head b
    ]
    out_specs = (
        pl.BlockSpec((BT, P, H), rows_map),
        pl.BlockSpec((BT, 1, H), rows_map),
        pl.BlockSpec((BT, 1, O), rows_map),
    )
    out_shape = (
        jax.ShapeDtypeStruct((B, P, H), jnp.float32),
        jax.ShapeDtypeStruct((B, 1, H), jnp.float32),
        jax.ShapeDtypeStruct((B, 1, O), jnp.float32),
    )

    kernel = make_mixer_kernel(BT, P, H, Hc, Ptok, O)
    y, t, o = pl.pallas_call(
        kernel,
        grid=grid,
        in_specs=in_specs,
        out_specs=out_specs,
        out_shape=out_shape,
        compiler_params=pltpu.CompilerParams(
            dimension_semantics=("parallel", "arbitrary"),
            vmem_limit_bytes=vmem_bytes),
    )(x, layers["tw0"], layers["tw1"], layers["cw0"], layers["cw1"],
      layers["tb0"], layers["tb1"], layers["small"], fg, fb,
      params["head_w"], params["head_b"])

    return o[:, 0, :], y, t[:, 0, :]


# ---------------------------- parameter construction --------------------------

def _linear(key, fan_in, shape_w, shape_b):
    k1, k2 = jax.random.split(key)
    bound = 1.0 / math.sqrt(fan_in)
    W = jax.random.uniform(k1, shape_w, jnp.float32, -bound, bound)
    b = jax.random.uniform(k2, shape_b, jnp.float32, -bound, bound)
    return W, b


def build_params(key, per_graph_size, time_channels, input_channels,
                 hidden_channels, out_channels, num_layers,
                 token_expansion_factor=0.5, channel_expansion_factor=4,
                 mxu_dtype=MXU_DTYPE):
    P, Td, C, H, O, L = (per_graph_size, time_channels, input_channels,
                         hidden_channels, out_channels, num_layers)
    Ptok = max(1, int(token_expansion_factor * P))
    Hc = int(channel_expansion_factor * H)
    Kpad = max(H, Hc)

    keys = iter(jax.random.split(key, 4 * L + 4))

    # TimeEncode (fixed, non-trainable): w = 1/10**linspace(0,9,dim), bias = 0
    time_w = jnp.asarray(
        (1.0 / 10 ** np.linspace(0, 9, Td, dtype=np.float32)).reshape(1, Td),
        jnp.float32)

    # FeatEncode linear on [edge_feats | time_feats] -> hidden
    feat_W, feat_b = _linear(next(keys), C + Td, (C + Td, H), (1, H))
    feat = dict(time_w=time_w,
                wf=feat_W[:C, :].astype(mxu_dtype),
                wt=feat_W[C:, :].astype(mxu_dtype),
                b=feat_b)

    def _pad(v, n):
        return jnp.pad(v, (0, n - v.shape[0]))

    tw0, tw1, cw0, cw1, tb0, tb1, small = ([] for _ in range(7))
    for _ in range(L):
        # token MLP: PyTorch [out, in] layout (used batched along the graph axis)
        tW0, tb0_ = _linear(next(keys), P, (Ptok, P), (Ptok, 1))
        tW1, tb1_ = _linear(next(keys), Ptok, (P, Ptok), (P, 1))
        # channel MLP: weights stored transposed (used as x @ W)
        cW0, cb0_ = _linear(next(keys), H, (H, Hc), (Hc,))
        cW1, cb1_ = _linear(next(keys), Hc, (Hc, H), (H,))
        tw0.append(tW0.astype(mxu_dtype)); tw1.append(tW1.astype(mxu_dtype))
        cw0.append(cW0.astype(mxu_dtype)); cw1.append(cW1.astype(mxu_dtype))
        tb0.append(tb0_); tb1.append(tb1_)
        small.append(jnp.stack([
            _pad(jnp.ones((H,), jnp.float32), Kpad),    # token LN gamma
            _pad(jnp.zeros((H,), jnp.float32), Kpad),   # token LN beta
            _pad(jnp.ones((H,), jnp.float32), Kpad),    # channel LN gamma
            _pad(jnp.zeros((H,), jnp.float32), Kpad),   # channel LN beta
            _pad(cb0_, Kpad),                           # channel bias 0 (Hc)
            _pad(cb1_, Kpad),                           # channel bias 1 (H)
        ], axis=0))                                     # (6, Kpad)

    layers = dict(tw0=jnp.stack(tw0), tw1=jnp.stack(tw1),
                  cw0=jnp.stack(cw0), cw1=jnp.stack(cw1),
                  tb0=jnp.stack(tb0), tb1=jnp.stack(tb1),
                  small=jnp.stack(small))

    head_W, head_b = _linear(next(keys), H, (H, O), (1, O))
    return dict(feat=feat, layers=layers,
                final_ln=(jnp.ones((1, H), jnp.float32),
                          jnp.zeros((1, H), jnp.float32)),
                head_w=head_W.astype(mxu_dtype), head_b=head_b)


# ------------------------------------ forward ----------------------------------

def mlp_mixer_forward(edge_feats, edge_ts, batch_size, inds, params,
                      per_graph_size, hidden_channels, out_channels, num_layers):
    feat = params["feat"]
    encoded = feat_encode(edge_feats, edge_ts, feat["time_w"],
                          feat["wf"], feat["wt"], feat["b"])            # [E, H]

    # scatter (glue, plain XLA): x starts at zero, so `x[inds] = x[inds] + encoded`
    # reduces to an indexed write (last-write-wins on duplicate inds, matching
    # PyTorch indexed assignment for unique inds).
    # TODO(synk): fuse this scatter into the mixer via a scalar-prefetched inverse row
    #             map to save one HBM round trip of the [B*P, H] activation tensor.
    x_flat = jnp.zeros((batch_size * per_graph_size, hidden_channels), jnp.float32)
    x_flat = x_flat.at[inds].set(encoded)
    x = x_flat.reshape(batch_size, per_graph_size, hidden_channels)

    x_out, y, t = mixer_forward(x, params, num_layers)                  # fused head
    return x_out, y, t


if __name__ == "__main__":
    # small shapes consistent with the module
    batch_size = 2
    per_graph_size = 8          # tokens per graph
    time_channels = 16
    input_channels = 16
    hidden_channels = 32
    out_channels = 16
    num_layers = 2
    num_edges = 12

    key = jax.random.PRNGKey(0)
    k_feat, k_ts, k_inds, k_params = jax.random.split(key, 4)

    edge_feats = jax.random.normal(k_feat, (num_edges, input_channels), jnp.float32)
    edge_ts = jax.random.uniform(k_ts, (num_edges,), jnp.float32, 0.0, 100.0)
    # unique scatter indices into the flattened [batch * per_graph_size] node slots
    inds = jax.random.permutation(k_inds, batch_size * per_graph_size)[:num_edges]

    params = build_params(k_params, per_graph_size, time_channels, input_channels,
                          hidden_channels, out_channels, num_layers)

    x_out, y_out, t_out = mlp_mixer_forward(
        edge_feats, edge_ts, batch_size, inds, params,
        per_graph_size, hidden_channels, out_channels, num_layers)

    jax.block_until_ready((x_out, y_out, t_out))
    assert x_out.shape == (batch_size, out_channels)
    assert y_out.shape == (batch_size, per_graph_size, hidden_channels)
    assert t_out.shape == (batch_size, hidden_channels)
    assert bool(jnp.all(jnp.isfinite(x_out)))
    print("KERNEL_OK")
</pallas_src>

<mosaic_0001>
module attributes {stable_mosaic.version = 11 : i64} {
  func.func @featenc_kernel(%arg0: i32, %arg1: memref<12x16xbf16, #tpu.memory_space<vmem>>, %arg2: memref<12x1xf32, #tpu.memory_space<vmem>>, %arg3: memref<1x16xf32, #tpu.memory_space<vmem>>, %arg4: memref<16x32xbf16, #tpu.memory_space<vmem>>, %arg5: memref<16x32xbf16, #tpu.memory_space<vmem>>, %arg6: memref<1x32xf32, #tpu.memory_space<vmem>>, %arg7: memref<12x32xf32, #tpu.memory_space<vmem>>) attributes {dimension_semantics = [#tpu.dimension_semantics<parallel>], iteration_bounds = array<i64: 1>, scalar_prefetch = 0 : i64, scratch_operands = 0 : i64, tpu.core_type = #tpu.core_type<tc>, window_params = [{transform_indices = @transform_0, window_bounds = array<i64: 12, 16>}, {transform_indices = @transform_1, window_bounds = array<i64: 12, 1>}, {pipeline_mode = #tpu.pipeline_mode<synchronous>, transform_indices = @transform_2, window_bounds = array<i64: 1, 16>}, {pipeline_mode = #tpu.pipeline_mode<synchronous>, transform_indices = @transform_3, window_bounds = array<i64: 16, 32>}, {pipeline_mode = #tpu.pipeline_mode<synchronous>, transform_indices = @transform_4, window_bounds = array<i64: 16, 32>}, {pipeline_mode = #tpu.pipeline_mode<synchronous>, transform_indices = @transform_5, window_bounds = array<i64: 1, 32>}, {transform_indices = @transform_6, window_bounds = array<i64: 12, 32>}]} {
    %c0 = arith.constant 0 : index
    %c0_0 = arith.constant 0 : index
    %0 = vector.load %arg2[%c0, %c0_0] : memref<12x1xf32, #tpu.memory_space<vmem>>, vector<12x1xf32>
    %c0_1 = arith.constant 0 : index
    %c0_2 = arith.constant 0 : index
    %1 = vector.load %arg3[%c0_1, %c0_2] : memref<1x16xf32, #tpu.memory_space<vmem>>, vector<1x16xf32>
    %2 = vector.broadcast %0 : vector<12x1xf32> to vector<12x16xf32>
    %3 = vector.broadcast %1 : vector<1x16xf32> to vector<12x16xf32>
    %4 = arith.mulf %2, %3 : vector<12x16xf32>
    %5 = math.cos %4 : vector<12x16xf32>
    %c0_3 = arith.constant 0 : index
    %c0_4 = arith.constant 0 : index
    %6 = vector.load %arg1[%c0_3, %c0_4] : memref<12x16xbf16, #tpu.memory_space<vmem>>, vector<12x16xbf16>
    %c0_5 = arith.constant 0 : index
    %c0_6 = arith.constant 0 : index
    %7 = vector.load %arg4[%c0_5, %c0_6] : memref<16x32xbf16, #tpu.memory_space<vmem>>, vector<16x32xbf16>
    %cst = arith.constant dense<0.000000e+00> : vector<12x32xf32>
    %8 = tpu.matmul %6, %7, %cst {dimension_numbers = #tpu.dot_dimension_numbers<[1], [0], [0], [1], [0, 0, 1, 1], [], []>} : vector<12x16xbf16>, vector<16x32xbf16>, vector<12x32xf32> -> vector<12x32xf32>
    %9 = arith.truncf %5 : vector<12x16xf32> to vector<12x16xbf16>
    %c0_7 = arith.constant 0 : index
    %c0_8 = arith.constant 0 : index
    %10 = vector.load %arg5[%c0_7, %c0_8] : memref<16x32xbf16, #tpu.memory_space<vmem>>, vector<16x32xbf16>
    %cst_9 = arith.constant dense<0.000000e+00> : vector<12x32xf32>
    %11 = tpu.matmul %9, %10, %cst_9 {dimension_numbers = #tpu.dot_dimension_numbers<[1], [0], [0], [1], [0, 0, 1, 1], [], []>} : vector<12x16xbf16>, vector<16x32xbf16>, vector<12x32xf32> -> vector<12x32xf32>
    %12 = arith.addf %8, %11 : vector<12x32xf32>
    %c0_10 = arith.constant 0 : index
    %c0_11 = arith.constant 0 : index
    %13 = vector.load %arg6[%c0_10, %c0_11] : memref<1x32xf32, #tpu.memory_space<vmem>>, vector<1x32xf32>
    %14 = vector.broadcast %13 : vector<1x32xf32> to vector<12x32xf32>
    %15 = arith.addf %12, %14 : vector<12x32xf32>
    %c0_12 = arith.constant 0 : index
    %c0_13 = arith.constant 0 : index
    %16 = vector.load %arg7[%c0_12, %c0_13] : memref<12x32xf32, #tpu.memory_space<vmem>>, vector<12x32xf32>
    tpu.vector_store %arg7[%c0_12, %c0_13], %15 {strides = array<i32>} : memref<12x32xf32, #tpu.memory_space<vmem>>, vector<12x32xf32>,
    return
  }
  func.func @transform_0(%arg0: i32) -> (i32, i32) {
    %c0_i32 = arith.constant 0 : i32
    %c0_i32_0 = arith.constant 0 : i32
    return %arg0, %c0_i32 : i32, i32
  }
  func.func @transform_1(%arg0: i32) -> (i32, i32) {
    %c0_i32 = arith.constant 0 : i32
    %c0_i32_0 = arith.constant 0 : i32
    return %arg0, %c0_i32 : i32, i32
  }
  func.func @transform_2(%arg0: i32) -> (i32, i32) {
    %c0_i32 = arith.constant 0 : i32
    %c0_i32_0 = arith.constant 0 : i32
    %c0_i32_1 = arith.constant 0 : i32
    return %c0_i32, %c0_i32_0 : i32, i32
  }
  func.func @transform_3(%arg0: i32) -> (i32, i32) {
    %c0_i32 = arith.constant 0 : i32
    %c0_i32_0 = arith.constant 0 : i32
    %c0_i32_1 = arith.constant 0 : i32
    return %c0_i32, %c0_i32_0 : i32, i32
  }
  func.func @transform_4(%arg0: i32) -> (i32, i32) {
    %c0_i32 = arith.constant 0 : i32
    %c0_i32_0 = arith.constant 0 : i32
    %c0_i32_1 = arith.constant 0 : i32
    return %c0_i32, %c0_i32_0 : i32, i32
  }
  func.func @transform_5(%arg0: i32) -> (i32, i32) {
    %c0_i32 = arith.constant 0 : i32
    %c0_i32_0 = arith.constant 0 : i32
    %c0_i32_1 = arith.constant 0 : i32
    return %c0_i32, %c0_i32_0 : i32, i32
  }
  func.func @transform_6(%arg0: i32) -> (i32, i32) {
    %c0_i32 = arith.constant 0 : i32
    %c0_i32_0 = arith.constant 0 : i32
    return %arg0, %c0_i32 : i32, i32
  }
}

</mosaic_0001>

<llo_original>
// kernel: tpu_custom_call.1
$region0: #{tpu_custom_call.1}
  #allocation0 [shape = 'u32[]', space=smem, size = 0x4, offset = 0x4, fixed_abs, tag = 'smem constant byte address 0x4 - core index']
  #allocation1 [shape = 'u32[144,128]{1,0:T(1,128)}', space=vmem, size = 0x12000, scoped, tag = 'internal scratch']
  %s0 = inlined_call_operand.vmem [shape: bf16[12,16], index: 0, kind: input, shape index: {}]
  %s1 = inlined_call_operand.vmem [shape: f32[12,1], index: 1, kind: input, shape index: {}]
  %s2 = inlined_call_operand.hbm [shape: f32[1,16], index: 2, kind: input, shape index: {}]
  %s3 = inlined_call_operand.vmem [shape: bf16[16,32], index: 3, kind: input, shape index: {}]
  %s4 = inlined_call_operand.vmem [shape: bf16[16,32], index: 4, kind: input, shape index: {}]
  %s5 = inlined_call_operand.vmem [shape: f32[1,32], index: 5, kind: input, shape index: {}]
  %s6 = inlined_call_operand.hbm [shape: f32[12,32], index: 6, kind: output, shape index: {}]
  %s7 = sld [smem:[#allocation0]]
  $region38: #{tpu_custom_call.1} parent=0
    _
  %s9 = ssub.s32 1, %s7
  %s10 = scalar_select 0, %s9, %s7
  $region1: #{tpu_custom_call.1} parent=0
    #allocation2 [shape = 'u8[512]{0}', space=vmem, size = 0x400, scoped, tag = 'input window, operand 2, single buffered']
    #allocation3 [shape = 's32[1]{0}', space=sflag, size = 0x4, scoped, tag = 'scoped memory for tpu_custom_call.1']
    #allocation4 [shape = 's32[1]{0}', space=sflag, size = 0x4, scoped, tag = 'scoped memory for tpu_custom_call.1']
    #allocation5 [shape = 'u8[8192]{0}', space=vmem, size = 0x2000, scoped, tag = 'output window, operand 0, single buffered']
    %11 = vsyncpa [#allocation3], 0
    %12 = vsyncpa [#allocation4], 0
    // Predicated region
    $region2: #{tpu_custom_call.1} parent=1 // pred_check
      _
    $region3: #{tpu_custom_call.1} parent=1 // pred_check_branch
      %14 = sbr.rel (0) target = $region5
    $region4: #{tpu_custom_call.1} parent=1 // pred_region
      _
    $region5: #{tpu_custom_call.1} parent=1 // pred_fallthru
      _
    // Predicated region
    $region6: #{tpu_custom_call.1} parent=1 // pred_check
      _
    $region7: #{tpu_custom_call.1} parent=1 // pred_check_branch
      %16 = sbr.rel (0) target = $region9
    $region8: #{tpu_custom_call.1} parent=1 // pred_region
      _
    $region9: #{tpu_custom_call.1} parent=1 // pred_fallthru
      _
    // Predicated region
    $region10: #{tpu_custom_call.1} parent=1 // pred_check
      _
    $region11: #{tpu_custom_call.1} parent=1 // pred_check_branch
      %18 = sbr.rel (0) target = $region13
    $region12: #{tpu_custom_call.1} parent=1 // pred_region
      %s20 = ssub.s32 16, 16
      %21 = vsyncadd [#allocation3], %s20
      %s23 = sshll.u32 [#allocation2], 4
      %s24 = int_to_ptr.vmem [resolvable:$true] %s23
      %26 = dma.hbm_to_vmem [thread:$0]  %s2, 16, %s24, [#allocation3]
    $region13: #{tpu_custom_call.1} parent=1 // pred_fallthru
      _
    // Predicated region
    $region14: #{tpu_custom_call.1} parent=1 // pred_check
      _
    $region15: #{tpu_custom_call.1} parent=1 // pred_check_branch
      %28 = sbr.rel (0) target = $region17
    $region16: #{tpu_custom_call.1} parent=1 // pred_region
      _
    $region17: #{tpu_custom_call.1} parent=1 // pred_fallthru
      _
    // Predicated region
    $region18: #{tpu_custom_call.1} parent=1 // pred_check
      _
    $region19: #{tpu_custom_call.1} parent=1 // pred_check_branch
      %30 = sbr.rel (0) target = $region21
    $region20: #{tpu_custom_call.1} parent=1 // pred_region
      _
    $region21: #{tpu_custom_call.1} parent=1 // pred_fallthru
      _
    // Predicated region
    $region22: #{tpu_custom_call.1} parent=1 // pred_check
      _
    $region23: #{tpu_custom_call.1} parent=1 // pred_check_branch
      %32 = sbr.rel (0) target = $region25
    $region24: #{tpu_custom_call.1} parent=1 // pred_region
      _
    $region25: #{tpu_custom_call.1} parent=1 // pred_fallthru
      _
    // Predicated region
    $region26: #{tpu_custom_call.1} parent=1 // pred_check
      _
    $region27: #{tpu_custom_call.1} parent=1 // pred_check_branch
      %34 = sbr.rel (0) target = $region29
    $region28: #{tpu_custom_call.1} parent=1 // pred_region
      %35 = dma.done [#allocation3], 16
    $region29: #{tpu_custom_call.1} parent=1 // pred_fallthru
      _
    %v37 = vld [vmem:[%s1] sm:$0xff]
    %v38 = vld [vmem:[%s1 + $0x8] sm:$0xf]
    %v39 = vld [vmem:[#allocation2] sm:$0x1]
    %41 = vset.pattern.permute.xlu0 0
    %42 = vperm.xlu0 %41, %v37
    %v43 = vpop.permute.xlu0 %42
    %46 = vset.pattern.permute.xlu0 0
    %47 = vperm.xlu0 %46, %v38
    %v48 = vpop.permute.xlu0 %47
    %v51 = vlaneseq
    %v52 = vshrl.u32 %v51, 7
    %v53 = vsub.s32 0, %v52
    %v54 = vrot.slane %v39, %v53
    %v56 = vmul.f32 %v43, %v54
    %v57 = vmul.f32 %v48, %v54
    %v58 = vand.u32 2147483647, %v56
    %vm59 = vcmp.le.f32.partialorder %v58, 0.7853982
    %vm60 = vcmp.lt.s32.totalorder %v56, 0
    %v61 = vand.u32 %v56, 2139095040
    %v62 = vshrl.u32 %v61, 23
    %v63 = vsub.s32 %v62, 127
    %v64 = vand.u32 2147483647, %v56
    %v65 = vand.u32 %v64, 8388607
    %v66 = vor.u32 %v65, 8388608
    %v67 = vsub.s32 0, %v66
    %v68 = vadd.s32 %v63, 1
    %vm69 = vcmp.gt.s32.totalorder %v68, 0
    %v70 = vsel %vm69, %v68, 0
    %v71 = vshrl.u32 %v70, 5
    %v72 = vand.u32 %v70, 31
    %v73 = vsub.s32 32, %v72
    %v74 = vshrl.u32 683565275, %v73
    %v75 = vshll.u32 683565275, %v72
    %v76 = vshrl.u32 2475754826, %v73
    %v77 = vor.u32 %v75, %v76
    %v78 = vshll.u32 2475754826, %v72
    %v79 = vshrl.u32 2131351028, %v73
    %v80 = vor.u32 %v78, %v79
    %v81 = vshll.u32 2131351028, %v72
    %v82 = vshrl.u32 2102212464, %v73
    %v83 = vor.u32 %v81, %v82
    %v84 = vshll.u32 2102212464, %v72
    %v85 = vshrl.u32 920167782, %v73
    %v86 = vor.u32 %v84, %v85
    %v87 = vshll.u32 920167782, %v72
    %v88 = vshrl.u32 1326507024, %v73
    %v89 = vor.u32 %v87, %v88
    %vm90 = vcmp.lt.s32.totalorder %v71, 1
    %vm91 = vcmp.lt.s32.totalorder %v71, 2
    %vm92 = vcmp.lt.s32.totalorder %v71, 3
    %vm93 = vcmp.lt.s32.totalorder %v71, 4
    %v94 = vsel %vm90, %v74, %v77
    %v95 = vsel %vm93, %v83, 2102212464
    %v96 = vsel %vm92, %v80, %v95
    %v97 = vsel %vm91, %v94, %v96
    %v98 = vsel %vm90, %v77, %v80
    %v99 = vsel %vm93, %v86, 920167782
    %v100 = vsel %vm92, %v83, %v99
    %v101 = vsel %vm91, %v98, %v100
    %v102 = vsel %vm90, %v80, %v83
    %v103 = vsel %vm93, %v89, 1326507024
    %v104 = vsel %vm92, %v86, %v103
    %v105 = vsel %vm91, %v102, %v104
    %v106 = vshll.u32 %v66, 8
    %v107 = vmul.u32.u64.compose %v106, %v105
    %v108 = vextract.low.u32 %v107
    %v109 = vextract.high.u32 %v107
    %v110 = vmul.u32.u64.compose %v106, %v101
    %v111 = vextract.low.u32 %v110
    %v112 = vextract.high.u32 %v110
    %v113 = vmul.u32 %v106, %v97
    %v114 = vadd.s32 %v109, %v111
    %vm115 = vc.u32 %v109, %v111
    %v116 = vadd.s32 %v112, 1
    %v117 = vsel %vm115, %v116, %v112
    %v118 = vadd.s32 %v113, %v117
    %v119 = vadd.s32 %v118, 536870912
    %v120 = vshrl.u32 %v119, 30
    %v121 = vshll.u32 %v120, 30
    %v122 = vsub.s32 %v118, %v121
    %vm123 = vcmp.lt.s32.totalorder %v122, 0
    %v124 = vsub.s32 0, %v122
    %v125 = vsel %vm123, %v124, %v122
    %v126 = vclz %v125
    %v127 = vsub.s32 %v126, 2
    %vm128 = vcmp.gt.s32.totalorder 0, %v127
    %v129 = vsel %vm128, 0, %v127
    %v130 = vsub.s32 32, %v129
    %v131 = vshll.u32 %v122, %v129
    %v132 = vshrl.u32 %v114, %v130
    %v133 = vor.u32 %v131, %v132
    %v134 = vsub.s32 4294967266, %v129
    %v135 = vadd.s32 %v134, 127
    %v136 = vshll.u32 %v135, 23
    %v137 = vor.u32 4788187, %v136
    %v138 = vand.u32 2147483647, %v137
    %v140 = vcvt.s32.f32 %v133
    %v141 = vmul.f32 %v140, %v138
    %v142 = vxor.u32 %v141, 2147483648
    %v143 = vsel %vm60, %v142, %v141
    %v144 = vsub.s32 4, %v120
    %v145 = vsel %vm60, %v144, %v120
    %v146 = vsel %vm59, %v56, %v143
    %v147 = vsel %vm59, 0, %v145
    %v148 = vcosq.f32.pop %v146
    %v149 = vsinq.f32.pop %v146
    %vm150 = vweird.f32 %v56
    %v151 = vand.u32 %v147, 3
    %vm152 = vcmp.lt.s32.totalorder %v151, 2
    %vm153 = vcmp.eq.s32.totalorder %v151, 0
    %v154 = vxor.u32 %v149, 2147483648
    %v155 = vsel %vm153, %v148, %v154
    %vm156 = vcmp.eq.s32.totalorder %v151, 2
    %v157 = vxor.u32 %v148, 2147483648
    %v158 = vsel %vm156, %v157, %v149
    %v159 = vsel %vm152, %v155, %v158
    %v160 = vsel %vm150, nan, %v159
    %v161 = vand.u32 2147483647, %v57
    %vm162 = vcmp.le.f32.partialorder %v161, 0.7853982
    %vm163 = vcmp.lt.s32.totalorder %v57, 0
    %v164 = vand.u32 %v57, 2139095040
    %v165 = vshrl.u32 %v164, 23
    %v166 = vsub.s32 %v165, 127
    %v167 = vand.u32 2147483647, %v57
    %v168 = vand.u32 %v167, 8388607
    %v169 = vor.u32 %v168, 8388608
    %v170 = vsub.s32 0, %v169
    %v171 = vadd.s32 %v166, 1
    %vm172 = vcmp.gt.s32.totalorder %v171, 0
    %v173 = vsel %vm172, %v171, 0
    %v174 = vshrl.u32 %v173, 5
    %v175 = vand.u32 %v173, 31
    %v176 = vsub.s32 32, %v175
    %v177 = vshrl.u32 683565275, %v176
    %v178 = vshll.u32 683565275, %v175
    %v179 = vshrl.u32 2475754826, %v176
    %v180 = vor.u32 %v178, %v179
    %v181 = vshll.u32 2475754826, %v175
    %v182 = vshrl.u32 2131351028, %v176
    %v183 = vor.u32 %v181, %v182
    %v184 = vshll.u32 2131351028, %v175
    %v185 = vshrl.u32 2102212464, %v176
    %v186 = vor.u32 %v184, %v185
    %v187 = vshll.u32 2102212464, %v175
    %v188 = vshrl.u32 920167782, %v176
    %v189 = vor.u32 %v187, %v188
    %v190 = vshll.u32 920167782, %v175
    %v191 = vshrl.u32 1326507024, %v176
    %v192 = vor.u32 %v190, %v191
    %vm193 = vcmp.lt.s32.totalorder %v174, 1
    %vm194 = vcmp.lt.s32.totalorder %v174, 2
    %vm195 = vcmp.lt.s32.totalorder %v174, 3
    %vm196 = vcmp.lt.s32.totalorder %v174, 4
    %v197 = vsel %vm193, %v177, %v180
    %v198 = vsel %vm196, %v186, 2102212464
    %v199 = vsel %vm195, %v183, %v198
    %v200 = vsel %vm194, %v197, %v199
    %v201 = vsel %vm193, %v180, %v183
    %v202 = vsel %vm196, %v189, 920167782
    %v203 = vsel %vm195, %v186, %v202
    %v204 = vsel %vm194, %v201, %v203
    %v205 = vsel %vm193, %v183, %v186
    %v206 = vsel %vm196, %v192, 1326507024
    %v207 = vsel %vm195, %v189, %v206
    %v208 = vsel %vm194, %v205, %v207
    %v209 = vshll.u32 %v169, 8
    %v210 = vmul.u32.u64.compose %v209, %v208
    %v211 = vextract.low.u32 %v210
    %v212 = vextract.high.u32 %v210
    %v213 = vmul.u32.u64.compose %v209, %v204
    %v214 = vextract.low.u32 %v213
    %v215 = vextract.high.u32 %v213
    %v216 = vmul.u32 %v209, %v200
    %v217 = vadd.s32 %v212, %v214
    %vm218 = vc.u32 %v212, %v214
    %v219 = vadd.s32 %v215, 1
    %v220 = vsel %vm218, %v219, %v215
    %v221 = vadd.s32 %v216, %v220
    %v222 = vadd.s32 %v221, 536870912
    %v223 = vshrl.u32 %v222, 30
    %v224 = vshll.u32 %v223, 30
    %v225 = vsub.s32 %v221, %v224
    %vm226 = vcmp.lt.s32.totalorder %v225, 0
    %v227 = vsub.s32 0, %v225
    %v228 = vsel %vm226, %v227, %v225
    %v229 = vclz %v228
    %v230 = vsub.s32 %v229, 2
    %vm231 = vcmp.gt.s32.totalorder 0, %v230
    %v232 = vsel %vm231, 0, %v230
    %v233 = vsub.s32 32, %v232
    %v234 = vshll.u32 %v225, %v232
    %v235 = vshrl.u32 %v217, %v233
    %v236 = vor.u32 %v234, %v235
    %v237 = vsub.s32 4294967266, %v232
    %v238 = vadd.s32 %v237, 127
    %v239 = vshll.u32 %v238, 23
    %v240 = vor.u32 4788187, %v239
    %v241 = vand.u32 2147483647, %v240
    %v243 = vcvt.s32.f32 %v236
    %v244 = vmul.f32 %v243, %v241
    %v245 = vxor.u32 %v244, 2147483648
    %v246 = vsel %vm163, %v245, %v244
    %v247 = vsub.s32 4, %v223
    %v248 = vsel %vm163, %v247, %v223
    %v249 = vsel %vm162, %v57, %v246
    %v250 = vsel %vm162, 0, %v248
    %v251 = vcosq.f32.pop %v249
    %v252 = vsinq.f32.pop %v249
    %vm253 = vweird.f32 %v57
    %v254 = vand.u32 %v250, 3
    %vm255 = vcmp.lt.s32.totalorder %v254, 2
    %vm256 = vcmp.eq.s32.totalorder %v254, 0
    %v257 = vxor.u32 %v252, 2147483648
    %v258 = vsel %vm256, %v251, %v257
    %vm259 = vcmp.eq.s32.totalorder %v254, 2
    %v260 = vxor.u32 %v251, 2147483648
    %v261 = vsel %vm259, %v260, %v252
    %v262 = vsel %vm255, %v258, %v261
    %v263 = vsel %vm253, nan, %v262
    %v264 = vld [vmem:[%s0] sm:$0xf]
    %v265 = vld [vmem:[%s0 + $0x4] sm:$0x3]
    %v266 = vld [vmem:[%s3] sm:$0xf]
    %v267 = vld [vmem:[%s3 + $0x4] sm:$0xf]
    %v268 = vpack.c.bf16 %v263, %v160
    %v269 = vld [vmem:[%s4] sm:$0xf]
    %v270 = vld [vmem:[%s4 + $0x4] sm:$0xf]
    %v273 = vunpack.c.l.b16 %v269
    %v274 = vunpack.c.l.b16 %v270
    %v275 = vpack.c.b16 %v274, %v273
    %vm277 = vcmask 130048
    %v279 = vsel %vm277, %v268, 0
    %281 = vmatprep.subr.bf16.mxu0 0
    %282 = vmatpush1.bf16.msra.mxu0 0
    %283 = vmatprep.subr.bf16.mxu0 0
    %284 = vmatpush1.bf16.msra.mxu0 0
    %285 = vmatprep.subr.bf16.mxu0 0
    %286 = vmatpush1.bf16.msra.mxu0 0
    %287 = vmatprep.subr.bf16.mxu0 0
    %288 = vmatpush1.bf16.msra.mxu0 0
    %289 = vmatprep.subr.bf16.mxu0 0
    %290 = vmatpush1.bf16.msra.mxu0 0
    %291 = vmatprep.subr.bf16.mxu0 0
    %292 = vmatpush1.bf16.msra.mxu0 0
    %293 = vmatprep.subr.bf16.mxu0 0
    %294 = vmatpush1.bf16.msra.mxu0 0
    %295 = vmatprep.subr.bf16.mxu0 0
    %296 = vmatpush1.bf16.msra.mxu0 %v275
    %297 = vmatprep.subr.bf16.mxu0 0
    %298 = vmatpush2.bf16.msra.mxu0 0
    %299 = vmatprep.subr.bf16.mxu0 0
    %300 = vmatpush2.bf16.msra.mxu0 0
    %301 = vmatprep.subr.bf16.mxu0 0
    %302 = vmatpush2.bf16.msra.mxu0 0
    %303 = vmatprep.subr.bf16.mxu0 0
    %304 = vmatpush2.bf16.msra.mxu0 0
    %305 = vmatprep.subr.bf16.mxu0 0
    %306 = vmatpush2.bf16.msra.mxu0 0
    %307 = vmatprep.subr.bf16.mxu0 0
    %308 = vmatpush2.bf16.msra.mxu0 0
    %309 = vmatprep.subr.bf16.mxu0 0
    %310 = vmatpush2.bf16.msra.mxu0 0
    %311 = vmatprep.subr.bf16.mxu0 0
    %312 = vmatpush2.bf16.msra.mxu0 0
    %313 = vmatprep.mubr.bf16.mxu0 0
    %314 = vmatmul.mubr.bf16.gmra.mxu0 %v279
    %v315 = vpop.f32.mrf.mxu0
    %v316 = vadd.f32 0.0, %v315
    %v317 = vpop.f32.mrf.mxu0
    %v318 = vpop.f32.mrf.mxu0
    %v319 = vadd.f32 0.0, %v318
    %v320 = vpop.f32.mrf.mxu0
    %321 = vdwg.mxu0
    %v324 = vunpack.c.l.b16 %v264
    %v325 = vunpack.c.l.b16 %v265
    %v326 = vpack.c.b16 %v325, %v324
    %v329 = vunpack.c.l.b16 %v266
    %v330 = vunpack.c.l.b16 %v267
    %v331 = vpack.c.b16 %v330, %v329
    %v334 = vsel %vm277, %v326, 0
    %336 = vmatprep.subr.bf16.mxu0 0
    %337 = vmatpush1.bf16.msra.mxu0 0
    %338 = vmatprep.subr.bf16.mxu0 0
    %339 = vmatpush1.bf16.msra.mxu0 0
    %340 = vmatprep.subr.bf16.mxu0 0
    %341 = vmatpush1.bf16.msra.mxu0 0
    %342 = vmatprep.subr.bf16.mxu0 0
    %343 = vmatpush1.bf16.msra.mxu0 0
    %344 = vmatprep.subr.bf16.mxu0 0
    %345 = vmatpush1.bf16.msra.mxu0 0
    %346 = vmatprep.subr.bf16.mxu0 0
    %347 = vmatpush1.bf16.msra.mxu0 0
    %348 = vmatprep.subr.bf16.mxu0 0
    %349 = vmatpush1.bf16.msra.mxu0 0
    %350 = vmatprep.subr.bf16.mxu0 0
    %351 = vmatpush1.bf16.msra.mxu0 %v331
    %352 = vmatprep.subr.bf16.mxu0 0
    %353 = vmatpush2.bf16.msra.mxu0 0
    %354 = vmatprep.subr.bf16.mxu0 0
    %355 = vmatpush2.bf16.msra.mxu0 0
    %356 = vmatprep.subr.bf16.mxu0 0
    %357 = vmatpush2.bf16.msra.mxu0 0
    %358 = vmatprep.subr.bf16.mxu0 0
    %359 = vmatpush2.bf16.msra.mxu0 0
    %360 = vmatprep.subr.bf16.mxu0 0
    %361 = vmatpush2.bf16.msra.mxu0 0
    %362 = vmatprep.subr.bf16.mxu0 0
    %363 = vmatpush2.bf16.msra.mxu0 0
    %364 = vmatprep.subr.bf16.mxu0 0
    %365 = vmatpush2.bf16.msra.mxu0 0
    %366 = vmatprep.subr.bf16.mxu0 0
    %367 = vmatpush2.bf16.msra.mxu0 0
    %368 = vmatprep.mubr.bf16.mxu0 0
    %369 = vmatmul.mubr.bf16.gmra.mxu0 %v334
    %v370 = vpop.f32.mrf.mxu0
    %v371 = vadd.f32 %v316, %v370
    %v372 = vpop.f32.mrf.mxu0
    %v373 = vpop.f32.mrf.mxu0
    %v374 = vadd.f32 %v319, %v373
    %v375 = vpop.f32.mrf.mxu0
    %376 = vdwg.mxu0
    %v377 = vld [vmem:[%s5] sm:$0x1]
    %v379 = vlaneseq
    %v380 = vshrl.u32 %v379, 7
    %v381 = vsub.s32 0, %v380
    %v382 = vrot.slane %v377, %v381
    %v384 = vadd.f32 %v371, %v382
    %v385 = vadd.f32 %v374, %v382
    %vm386 = vcmask 261120
    %387 = vst.msk [vmem:[#allocation5] sm:$0xff] %vm386, %v384
    %vm388 = vcmask 257024
    %389 = vst.msk [vmem:[#allocation5 + $0x8] sm:$0xf] %vm388, %v385
    // Predicated region
    $region30: #{tpu_custom_call.1} parent=1 // pred_check
      _
    $region31: #{tpu_custom_call.1} parent=1 // pred_check_branch
      %391 = sbr.rel (0) target = $region33
    $region32: #{tpu_custom_call.1} parent=1 // pred_region
      %s393 = ssub.s32 256, 256
      %394 = vsyncadd [#allocation4], %s393
      %s395 = sshll.u32 [#allocation5], 4
      %s396 = int_to_ptr.vmem [resolvable:$true] %s395
      %401 = dma.vmem_to_hbm [thread:$0]  %s396, 256, %s6, [#allocation4], 128, 128, 8
    $region33: #{tpu_custom_call.1} parent=1 // pred_fallthru
      _
    // Predicated region
    $region34: #{tpu_custom_call.1} parent=1 // pred_check
      _
    $region35: #{tpu_custom_call.1} parent=1 // pred_check_branch
      %403 = sbr.rel (0) target = $region37
    $region36: #{tpu_custom_call.1} parent=1 // pred_region
      %404 = dma.done [#allocation4], 256
    $region37: #{tpu_custom_call.1} parent=1 // pred_fallthru
      _
    %405 = vsyncpa [#allocation3], 1
    %406 = vsyncpa [#allocation4], 1

</llo_original>
